<compile_context>
chip_gen: v5e
topology: v5e:2x2
jax: 0.10.0
libtpu: 0.0.40
codegen_flags: <defaults>
</compile_context>

<pallas_src>
import jax
import jax.numpy as jnp
from jax.experimental import pallas as pl
from jax.experimental.pallas import tpu as pltpu


def _round_up(x, m):
    return ((x + m - 1) // m) * m


def _block_diag(a, b):
    top = jnp.concatenate([a, jnp.zeros((a.shape[0], b.shape[1]), a.dtype)], axis=1)
    bot = jnp.concatenate([jnp.zeros((b.shape[0], a.shape[1]), b.dtype), b], axis=1)
    return jnp.concatenate([top, bot], axis=0)


def _cond_policy_kernel(x_ref,
                        w1_ref, b1_ref, w2_ref, b2_ref,
                        w3_ref, b3_ref, w4_ref, b4_ref,
                        out_ref):
    wdt = w1_ref.dtype
    # Branch layer 1 (both branches fused via block-diagonal weight) + ReLU.
    h = jnp.dot(x_ref[...], w1_ref[...], preferred_element_type=jnp.float32) + b1_ref[...]
    h = jnp.maximum(h, 0.0)
    # Branch layer 2 (no activation) -> this *is* concat([state_out, cond_out], -1).
    h = jnp.dot(h.astype(wdt), w2_ref[...], preferred_element_type=jnp.float32) + b2_ref[...]
    # Final module: Linear -> ReLU -> Linear (lane-dense padded output columns).
    h = jnp.dot(h.astype(wdt), w3_ref[...], preferred_element_type=jnp.float32) + b3_ref[...]
    h = jnp.maximum(h, 0.0)
    out = jnp.dot(h.astype(wdt), w4_ref[...], preferred_element_type=jnp.float32) + b4_ref[...]
    out_ref[...] = out.astype(out_ref.dtype)


def _prepare_fused_params(params, *, use_bf16):
    """Fold per-branch weights into block-diagonal weights; pad output to 128 lanes."""
    w1 = _block_diag(params["w1s"], params["w1c"])
    b1 = jnp.concatenate([params["b1s"], params["b1c"]], axis=-1)
    w2 = _block_diag(params["w2s"], params["w2c"])
    b2 = jnp.concatenate([params["b2s"], params["b2c"]], axis=-1)
    w3 = params["w1f"]
    b3 = params["b1f"]
    A = params["w2f"].shape[1]
    A_pad = _round_up(A, 128)                       # lane-dense output slab
    w4 = jnp.pad(params["w2f"], ((0, 0), (0, A_pad - A)))
    b4 = jnp.pad(params["b2f"], ((0, 0), (0, A_pad - A)))

    wdt = jnp.bfloat16 if use_bf16 else jnp.float32
    w1, w2, w3, w4 = (w.astype(wdt) for w in (w1, w2, w3, w4))
    b1, b2, b3, b4 = (b.astype(jnp.float32) for b in (b1, b2, b3, b4))
    return w1, b1, w2, b2, w3, b3, w4, b4


def conditional_discrete_policy_forward(states, conditioning, params, *,
                                        batch_tile=256, use_bf16=False,
                                        single_buffer_weights=True):
    """out = final_mlp(cat(state_mlp(states), cond_mlp(conditioning), -1))."""
    B, S = states.shape
    Bc, C = conditioning.shape
    assert Bc == B
    A = params["w2f"].shape[1]

    w1, b1, w2, b2, w3, b3, w4, b4 = _prepare_fused_params(params, use_bf16=use_bf16)
    A_pad = w4.shape[1]
    D = S + C

    # MXU-shaped batch tile (multiple of 8 sublanes; default 256 for v6e/v7x MXU).
    # Ragged / small batches are handled by clamping + zero-padding the batch.
    batch_tile = max(8, (min(batch_tile, _round_up(B, 8)) // 8) * 8)
    B_pad = _round_up(B, batch_tile)

    x = jnp.concatenate([states, conditioning], axis=-1).astype(jnp.float32)
    if B_pad != B:
        x = jnp.pad(x, ((0, B_pad - B), (0, 0)))
    if use_bf16:
        x = x.astype(jnp.bfloat16)

    grid = (B_pad // batch_tile,)  # "parallel": on v7x this axis splits across both TCs.

    def _call(single_buffer):
        if single_buffer:
            # Constant-index weight blocks: single-buffer to halve their VMEM footprint.
            wspec = lambda a: pl.BlockSpec(a.shape, lambda i: (0, 0),
                                           pipeline_mode=pl.Buffered(1))
        else:
            wspec = lambda a: pl.BlockSpec(a.shape, lambda i: (0, 0))
        fn = pl.pallas_call(
            _cond_policy_kernel,
            out_shape=jax.ShapeDtypeStruct((B_pad, A_pad), jnp.float32),
            grid_spec=pltpu.PrefetchScalarGridSpec(
                num_scalar_prefetch=0,
                grid=grid,
                in_specs=[
                    pl.BlockSpec((batch_tile, D), lambda i: (i, 0)),   # fused inputs
                    wspec(w1), wspec(b1), wspec(w2), wspec(b2),
                    wspec(w3), wspec(b3), wspec(w4), wspec(b4),
                ],
                out_specs=pl.BlockSpec((batch_tile, A_pad), lambda i: (i, 0)),
            ),
            compiler_params=pltpu.CompilerParams(
                dimension_semantics=("parallel",),
            ),
        )
        return fn(x, w1, b1, w2, b2, w3, b3, w4, b4)

    if single_buffer_weights:
        try:
            out_pad = jax.block_until_ready(_call(True))
        except Exception:
            # Fallback if this JAX build rejects pipeline_mode=pl.Buffered(1).
            out_pad = _call(False)
    else:
        out_pad = _call(False)

    return out_pad[:B, :A]


def _reference_forward(states, conditioning, params):
    hs = jnp.maximum(states @ params["w1s"] + params["b1s"], 0.0) @ params["w2s"] + params["b2s"]
    hc = jnp.maximum(conditioning @ params["w1c"] + params["b1c"], 0.0) @ params["w2c"] + params["b2c"]
    cat = jnp.concatenate([hs, hc], axis=-1)
    hf = jnp.maximum(cat @ params["w1f"] + params["b1f"], 0.0)
    return hf @ params["w2f"] + params["b2f"]


def _init_params(key, state_dim, cond_dim, hidden, n_actions):
    ks = jax.random.split(key, 6)

    def lin(k, fan_in, fan_out):
        # deterministic small-scale init (synthetic weights, not a checkpoint)
        bound = 1.0 / jnp.sqrt(fan_in)
        kw, kb = jax.random.split(k)
        w = jax.random.uniform(kw, (fan_in, fan_out), jnp.float32, -bound, bound)
        b = jax.random.uniform(kb, (1, fan_out), jnp.float32, -bound, bound)
        return w, b

    w1s, b1s = lin(ks[0], state_dim, hidden)
    w2s, b2s = lin(ks[1], hidden, hidden)
    w1c, b1c = lin(ks[2], cond_dim, hidden)
    w2c, b2c = lin(ks[3], hidden, hidden)
    w1f, b1f = lin(ks[4], 2 * hidden, hidden)
    w2f, b2f = lin(ks[5], hidden, n_actions)
    return {
        "w1s": w1s, "b1s": b1s, "w2s": w2s, "b2s": b2s,
        "w1c": w1c, "b1c": b1c, "w2c": w2c, "b2c": b2c,
        "w1f": w1f, "b1f": b1f, "w2f": w2f, "b2f": b2f,
    }


if __name__ == "__main__":
    # Small, module-consistent shapes: batch=8, state_dim=16, cond_dim=8,
    # hidden=32, n_actions=5 (forward policy -> output dim == n_actions).
    B, S, C, H, A = 8, 16, 8, 32, 5

    key = jax.random.PRNGKey(0)
    k_x, k_c, k_p, k_x2, k_c2 = jax.random.split(key, 5)
    states = jax.random.normal(k_x, (B, S), jnp.float32)        # preprocessed states
    conditioning = jax.random.normal(k_c, (B, C), jnp.float32)  # conditioning tensor
    params = _init_params(k_p, S, C, H, A)

    # f32 path (exact vs. reference).
    out = conditional_discrete_policy_forward(states, conditioning, params)
    out = jax.block_until_ready(out)
    ref = _reference_forward(states, conditioning, params)
    assert out.shape == (B, A) and out.dtype == jnp.float32
    assert jnp.allclose(out, ref, atol=1e-5, rtol=1e-5)

    # Ragged batch size (exercises wrapper-side padding instead of the old assert).
    B2 = 13
    states2 = jax.random.normal(k_x2, (B2, S), jnp.float32)
    conditioning2 = jax.random.normal(k_c2, (B2, C), jnp.float32)
    out2 = jax.block_until_ready(
        conditional_discrete_policy_forward(states2, conditioning2, params))
    ref2 = _reference_forward(states2, conditioning2, params)
    assert out2.shape == (B2, A)
    assert jnp.allclose(out2, ref2, atol=1e-5, rtol=1e-5)

    # bf16 MXU-input path (f32 accumulation) — fast path on v6e/v7x.
    out_bf16 = jax.block_until_ready(
        conditional_discrete_policy_forward(states, conditioning, params, use_bf16=True))
    assert out_bf16.shape == (B, A)
    assert jnp.allclose(out_bf16, ref, atol=5e-2, rtol=5e-2)

    # TODO(synk): to_probability_distribution (Categorical + masking/temperature/epsilon)
    # is a sampling-time utility, not part of forward(); not implemented in-kernel.
    print("KERNEL_OK")
</pallas_src>

<mosaic_0001>
module attributes {stable_mosaic.version = 11 : i64} {
  func.func @_cond_policy_kernel(%arg0: i32, %arg1: memref<8x24xf32, #tpu.memory_space<vmem>>, %arg2: memref<24x64xf32, #tpu.memory_space<vmem>>, %arg3: memref<1x64xf32, #tpu.memory_space<vmem>>, %arg4: memref<64x64xf32, #tpu.memory_space<vmem>>, %arg5: memref<1x64xf32, #tpu.memory_space<vmem>>, %arg6: memref<64x32xf32, #tpu.memory_space<vmem>>, %arg7: memref<1x32xf32, #tpu.memory_space<vmem>>, %arg8: memref<32x128xf32, #tpu.memory_space<vmem>>, %arg9: memref<1x128xf32, #tpu.memory_space<vmem>>, %arg10: memref<8x128xf32, #tpu.memory_space<vmem>>) attributes {dimension_semantics = [#tpu.dimension_semantics<parallel>], iteration_bounds = array<i64: 1>, scalar_prefetch = 0 : i64, scratch_operands = 0 : i64, tpu.core_type = #tpu.core_type<tc>, window_params = [{transform_indices = @transform_0, window_bounds = array<i64: 8, 24>}, {pipeline_mode = #tpu.pipeline_mode<synchronous>, transform_indices = @transform_1, window_bounds = array<i64: 24, 64>}, {pipeline_mode = #tpu.pipeline_mode<synchronous>, transform_indices = @transform_2, window_bounds = array<i64: 1, 64>}, {pipeline_mode = #tpu.pipeline_mode<synchronous>, transform_indices = @transform_3, window_bounds = array<i64: 64, 64>}, {pipeline_mode = #tpu.pipeline_mode<synchronous>, transform_indices = @transform_4, window_bounds = array<i64: 1, 64>}, {pipeline_mode = #tpu.pipeline_mode<synchronous>, transform_indices = @transform_5, window_bounds = array<i64: 64, 32>}, {pipeline_mode = #tpu.pipeline_mode<synchronous>, transform_indices = @transform_6, window_bounds = array<i64: 1, 32>}, {pipeline_mode = #tpu.pipeline_mode<synchronous>, transform_indices = @transform_7, window_bounds = array<i64: 32, 128>}, {pipeline_mode = #tpu.pipeline_mode<synchronous>, transform_indices = @transform_8, window_bounds = array<i64: 1, 128>}, {transform_indices = @transform_9, window_bounds = array<i64: 8, 128>}]} {
    %c0 = arith.constant 0 : index
    %c0_0 = arith.constant 0 : index
    %0 = vector.load %arg1[%c0, %c0_0] : memref<8x24xf32, #tpu.memory_space<vmem>>, vector<8x24xf32>
    %c0_1 = arith.constant 0 : index
    %c0_2 = arith.constant 0 : index
    %1 = vector.load %arg2[%c0_1, %c0_2] : memref<24x64xf32, #tpu.memory_space<vmem>>, vector<24x64xf32>
    %cst = arith.constant dense<0.000000e+00> : vector<8x64xf32>
    %2 = tpu.matmul %0, %1, %cst {dimension_numbers = #tpu.dot_dimension_numbers<[1], [0], [0], [1], [0, 0, 1, 1], [], []>} : vector<8x24xf32>, vector<24x64xf32>, vector<8x64xf32> -> vector<8x64xf32>
    %c0_3 = arith.constant 0 : index
    %c0_4 = arith.constant 0 : index
    %3 = vector.load %arg3[%c0_3, %c0_4] : memref<1x64xf32, #tpu.memory_space<vmem>>, vector<1x64xf32>
    %4 = vector.broadcast %3 : vector<1x64xf32> to vector<8x64xf32>
    %5 = arith.addf %2, %4 : vector<8x64xf32>
    %cst_5 = arith.constant 0.000000e+00 : f32
    %6 = vector.broadcast %cst_5 : f32 to vector<8x64xf32>
    %7 = arith.maximumf %5, %6 : vector<8x64xf32>
    %c0_6 = arith.constant 0 : index
    %c0_7 = arith.constant 0 : index
    %8 = vector.load %arg4[%c0_6, %c0_7] : memref<64x64xf32, #tpu.memory_space<vmem>>, vector<64x64xf32>
    %cst_8 = arith.constant dense<0.000000e+00> : vector<8x64xf32>
    %9 = tpu.matmul %7, %8, %cst_8 {dimension_numbers = #tpu.dot_dimension_numbers<[1], [0], [0], [1], [0, 0, 1, 1], [], []>} : vector<8x64xf32>, vector<64x64xf32>, vector<8x64xf32> -> vector<8x64xf32>
    %c0_9 = arith.constant 0 : index
    %c0_10 = arith.constant 0 : index
    %10 = vector.load %arg5[%c0_9, %c0_10] : memref<1x64xf32, #tpu.memory_space<vmem>>, vector<1x64xf32>
    %11 = vector.broadcast %10 : vector<1x64xf32> to vector<8x64xf32>
    %12 = arith.addf %9, %11 : vector<8x64xf32>
    %c0_11 = arith.constant 0 : index
    %c0_12 = arith.constant 0 : index
    %13 = vector.load %arg6[%c0_11, %c0_12] : memref<64x32xf32, #tpu.memory_space<vmem>>, vector<64x32xf32>
    %cst_13 = arith.constant dense<0.000000e+00> : vector<8x32xf32>
    %14 = tpu.matmul %12, %13, %cst_13 {dimension_numbers = #tpu.dot_dimension_numbers<[1], [0], [0], [1], [0, 0, 1, 1], [], []>} : vector<8x64xf32>, vector<64x32xf32>, vector<8x32xf32> -> vector<8x32xf32>
    %c0_14 = arith.constant 0 : index
    %c0_15 = arith.constant 0 : index
    %15 = vector.load %arg7[%c0_14, %c0_15] : memref<1x32xf32, #tpu.memory_space<vmem>>, vector<1x32xf32>
    %16 = vector.broadcast %15 : vector<1x32xf32> to vector<8x32xf32>
    %17 = arith.addf %14, %16 : vector<8x32xf32>
    %cst_16 = arith.constant 0.000000e+00 : f32
    %18 = vector.broadcast %cst_16 : f32 to vector<8x32xf32>
    %19 = arith.maximumf %17, %18 : vector<8x32xf32>
    %c0_17 = arith.constant 0 : index
    %c0_18 = arith.constant 0 : index
    %20 = vector.load %arg8[%c0_17, %c0_18] : memref<32x128xf32, #tpu.memory_space<vmem>>, vector<32x128xf32>
    %cst_19 = arith.constant dense<0.000000e+00> : vector<8x128xf32>
    %21 = tpu.matmul %19, %20, %cst_19 {dimension_numbers = #tpu.dot_dimension_numbers<[1], [0], [0], [1], [0, 0, 1, 1], [], []>} : vector<8x32xf32>, vector<32x128xf32>, vector<8x128xf32> -> vector<8x128xf32>
    %c0_20 = arith.constant 0 : index
    %c0_21 = arith.constant 0 : index
    %22 = vector.load %arg9[%c0_20, %c0_21] : memref<1x128xf32, #tpu.memory_space<vmem>>, vector<1x128xf32>
    %23 = vector.broadcast %22 : vector<1x128xf32> to vector<8x128xf32>
    %24 = arith.addf %21, %23 : vector<8x128xf32>
    %c0_22 = arith.constant 0 : index
    %c0_23 = arith.constant 0 : index
    %25 = vector.load %arg10[%c0_22, %c0_23] : memref<8x128xf32, #tpu.memory_space<vmem>>, vector<8x128xf32>
    tpu.vector_store %arg10[%c0_22, %c0_23], %24 {strides = array<i32>} : memref<8x128xf32, #tpu.memory_space<vmem>>, vector<8x128xf32>,
    return
  }
  func.func @transform_0(%arg0: i32) -> (i32, i32) {
    %c0_i32 = arith.constant 0 : i32
    %c0_i32_0 = arith.constant 0 : i32
    return %arg0, %c0_i32 : i32, i32
  }
  func.func @transform_1(%arg0: i32) -> (i32, i32) {
    %c0_i32 = arith.constant 0 : i32
    %c0_i32_0 = arith.constant 0 : i32
    %c0_i32_1 = arith.constant 0 : i32
    return %c0_i32, %c0_i32_0 : i32, i32
  }
  func.func @transform_2(%arg0: i32) -> (i32, i32) {
    %c0_i32 = arith.constant 0 : i32
    %c0_i32_0 = arith.constant 0 : i32
    %c0_i32_1 = arith.constant 0 : i32
    return %c0_i32, %c0_i32_0 : i32, i32
  }
  func.func @transform_3(%arg0: i32) -> (i32, i32) {
    %c0_i32 = arith.constant 0 : i32
    %c0_i32_0 = arith.constant 0 : i32
    %c0_i32_1 = arith.constant 0 : i32
    return %c0_i32, %c0_i32_0 : i32, i32
  }
  func.func @transform_4(%arg0: i32) -> (i32, i32) {
    %c0_i32 = arith.constant 0 : i32
    %c0_i32_0 = arith.constant 0 : i32
    %c0_i32_1 = arith.constant 0 : i32
    return %c0_i32, %c0_i32_0 : i32, i32
  }
  func.func @transform_5(%arg0: i32) -> (i32, i32) {
    %c0_i32 = arith.constant 0 : i32
    %c0_i32_0 = arith.constant 0 : i32
    %c0_i32_1 = arith.constant 0 : i32
    return %c0_i32, %c0_i32_0 : i32, i32
  }
  func.func @transform_6(%arg0: i32) -> (i32, i32) {
    %c0_i32 = arith.constant 0 : i32
    %c0_i32_0 = arith.constant 0 : i32
    %c0_i32_1 = arith.constant 0 : i32
    return %c0_i32, %c0_i32_0 : i32, i32
  }
  func.func @transform_7(%arg0: i32) -> (i32, i32) {
    %c0_i32 = arith.constant 0 : i32
    %c0_i32_0 = arith.constant 0 : i32
    %c0_i32_1 = arith.constant 0 : i32
    return %c0_i32, %c0_i32_0 : i32, i32
  }
  func.func @transform_8(%arg0: i32) -> (i32, i32) {
    %c0_i32 = arith.constant 0 : i32
    %c0_i32_0 = arith.constant 0 : i32
    %c0_i32_1 = arith.constant 0 : i32
    return %c0_i32, %c0_i32_0 : i32, i32
  }
  func.func @transform_9(%arg0: i32) -> (i32, i32) {
    %c0_i32 = arith.constant 0 : i32
    %c0_i32_0 = arith.constant 0 : i32
    return %arg0, %c0_i32 : i32, i32
  }
}

module attributes {stable_mosaic.version = 11 : i64} {
  func.func @_cond_policy_kernel(%arg0: i32, %arg1: memref<8x24xf32, #tpu.memory_space<vmem>>, %arg2: memref<24x64xf32, #tpu.memory_space<vmem>>, %arg3: memref<1x64xf32, #tpu.memory_space<vmem>>, %arg4: memref<64x64xf32, #tpu.memory_space<vmem>>, %arg5: memref<1x64xf32, #tpu.memory_space<vmem>>, %arg6: memref<64x32xf32, #tpu.memory_space<vmem>>, %arg7: memref<1x32xf32, #tpu.memory_space<vmem>>, %arg8: memref<32x128xf32, #tpu.memory_space<vmem>>, %arg9: memref<1x128xf32, #tpu.memory_space<vmem>>, %arg10: memref<8x128xf32, #tpu.memory_space<vmem>>) attributes {dimension_semantics = [#tpu.dimension_semantics<parallel>], iteration_bounds = array<i64: 1>, scalar_prefetch = 0 : i64, scratch_operands = 0 : i64, tpu.core_type = #tpu.core_type<tc>, window_params = [{transform_indices = @transform_0, window_bounds = array<i64: 8, 24>}, {pipeline_mode = #tpu.pipeline_mode<synchronous>, transform_indices = @transform_1, window_bounds = array<i64: 24, 64>}, {pipeline_mode = #tpu.pipeline_mode<synchronous>, transform_indices = @transform_2, window_bounds = array<i64: 1, 64>}, {pipeline_mode = #tpu.pipeline_mode<synchronous>, transform_indices = @transform_3, window_bounds = array<i64: 64, 64>}, {pipeline_mode = #tpu.pipeline_mode<synchronous>, transform_indices = @transform_4, window_bounds = array<i64: 1, 64>}, {pipeline_mode = #tpu.pipeline_mode<synchronous>, transform_indices = @transform_5, window_bounds = array<i64: 64, 32>}, {pipeline_mode = #tpu.pipeline_mode<synchronous>, transform_indices = @transform_6, window_bounds = array<i64: 1, 32>}, {pipeline_mode = #tpu.pipeline_mode<synchronous>, transform_indices = @transform_7, window_bounds = array<i64: 32, 128>}, {pipeline_mode = #tpu.pipeline_mode<synchronous>, transform_indices = @transform_8, window_bounds = array<i64: 1, 128>}, {transform_indices = @transform_9, window_bounds = array<i64: 8, 128>}]} {
    %c0 = arith.constant 0 : index
    %c0_0 = arith.constant 0 : index
    %0 = vector.load %arg1[%c0, %c0_0] : memref<8x24xf32, #tpu.memory_space<vmem>>, vector<8x24xf32>
    %c0_1 = arith.constant 0 : index
    %c0_2 = arith.constant 0 : index
    %1 = vector.load %arg2[%c0_1, %c0_2] : memref<24x64xf32, #tpu.memory_space<vmem>>, vector<24x64xf32>
    %cst = arith.constant dense<0.000000e+00> : vector<8x64xf32>
    %2 = tpu.matmul %0, %1, %cst {dimension_numbers = #tpu.dot_dimension_numbers<[1], [0], [0], [1], [0, 0, 1, 1], [], []>} : vector<8x24xf32>, vector<24x64xf32>, vector<8x64xf32> -> vector<8x64xf32>
    %c0_3 = arith.constant 0 : index
    %c0_4 = arith.constant 0 : index
    %3 = vector.load %arg3[%c0_3, %c0_4] : memref<1x64xf32, #tpu.memory_space<vmem>>, vector<1x64xf32>
    %4 = vector.broadcast %3 : vector<1x64xf32> to vector<8x64xf32>
    %5 = arith.addf %2, %4 : vector<8x64xf32>
    %cst_5 = arith.constant 0.000000e+00 : f32
    %6 = vector.broadcast %cst_5 : f32 to vector<8x64xf32>
    %7 = arith.maximumf %5, %6 : vector<8x64xf32>
    %c0_6 = arith.constant 0 : index
    %c0_7 = arith.constant 0 : index
    %8 = vector.load %arg4[%c0_6, %c0_7] : memref<64x64xf32, #tpu.memory_space<vmem>>, vector<64x64xf32>
    %cst_8 = arith.constant dense<0.000000e+00> : vector<8x64xf32>
    %9 = tpu.matmul %7, %8, %cst_8 {dimension_numbers = #tpu.dot_dimension_numbers<[1], [0], [0], [1], [0, 0, 1, 1], [], []>} : vector<8x64xf32>, vector<64x64xf32>, vector<8x64xf32> -> vector<8x64xf32>
    %c0_9 = arith.constant 0 : index
    %c0_10 = arith.constant 0 : index
    %10 = vector.load %arg5[%c0_9, %c0_10] : memref<1x64xf32, #tpu.memory_space<vmem>>, vector<1x64xf32>
    %11 = vector.broadcast %10 : vector<1x64xf32> to vector<8x64xf32>
    %12 = arith.addf %9, %11 : vector<8x64xf32>
    %c0_11 = arith.constant 0 : index
    %c0_12 = arith.constant 0 : index
    %13 = vector.load %arg6[%c0_11, %c0_12] : memref<64x32xf32, #tpu.memory_space<vmem>>, vector<64x32xf32>
    %cst_13 = arith.constant dense<0.000000e+00> : vector<8x32xf32>
    %14 = tpu.matmul %12, %13, %cst_13 {dimension_numbers = #tpu.dot_dimension_numbers<[1], [0], [0], [1], [0, 0, 1, 1], [], []>} : vector<8x64xf32>, vector<64x32xf32>, vector<8x32xf32> -> vector<8x32xf32>
    %c0_14 = arith.constant 0 : index
    %c0_15 = arith.constant 0 : index
    %15 = vector.load %arg7[%c0_14, %c0_15] : memref<1x32xf32, #tpu.memory_space<vmem>>, vector<1x32xf32>
    %16 = vector.broadcast %15 : vector<1x32xf32> to vector<8x32xf32>
    %17 = arith.addf %14, %16 : vector<8x32xf32>
    %cst_16 = arith.constant 0.000000e+00 : f32
    %18 = vector.broadcast %cst_16 : f32 to vector<8x32xf32>
    %19 = arith.maximumf %17, %18 : vector<8x32xf32>
    %c0_17 = arith.constant 0 : index
    %c0_18 = arith.constant 0 : index
    %20 = vector.load %arg8[%c0_17, %c0_18] : memref<32x128xf32, #tpu.memory_space<vmem>>, vector<32x128xf32>
    %cst_19 = arith.constant dense<0.000000e+00> : vector<8x128xf32>
    %21 = tpu.matmul %19, %20, %cst_19 {dimension_numbers = #tpu.dot_dimension_numbers<[1], [0], [0], [1], [0, 0, 1, 1], [], []>} : vector<8x32xf32>, vector<32x128xf32>, vector<8x128xf32> -> vector<8x128xf32>
    %c0_20 = arith.constant 0 : index
    %c0_21 = arith.constant 0 : index
    %22 = vector.load %arg9[%c0_20, %c0_21] : memref<1x128xf32, #tpu.memory_space<vmem>>, vector<1x128xf32>
    %23 = vector.broadcast %22 : vector<1x128xf32> to vector<8x128xf32>
    %24 = arith.addf %21, %23 : vector<8x128xf32>
    %c0_22 = arith.constant 0 : index
    %c0_23 = arith.constant 0 : index
    %25 = vector.load %arg10[%c0_22, %c0_23] : memref<8x128xf32, #tpu.memory_space<vmem>>, vector<8x128xf32>
    tpu.vector_store %arg10[%c0_22, %c0_23], %24 {strides = array<i32>} : memref<8x128xf32, #tpu.memory_space<vmem>>, vector<8x128xf32>,
    return
  }
  func.func @transform_0(%arg0: i32) -> (i32, i32) {
    %c0_i32 = arith.constant 0 : i32
    %c0_i32_0 = arith.constant 0 : i32
    return %arg0, %c0_i32 : i32, i32
  }
  func.func @transform_1(%arg0: i32) -> (i32, i32) {
    %c0_i32 = arith.constant 0 : i32
    %c0_i32_0 = arith.constant 0 : i32
    %c0_i32_1 = arith.constant 0 : i32
    return %c0_i32, %c0_i32_0 : i32, i32
  }
  func.func @transform_2(%arg0: i32) -> (i32, i32) {
    %c0_i32 = arith.constant 0 : i32
    %c0_i32_0 = arith.constant 0 : i32
    %c0_i32_1 = arith.constant 0 : i32
    return %c0_i32, %c0_i32_0 : i32, i32
  }
  func.func @transform_3(%arg0: i32) -> (i32, i32) {
    %c0_i32 = arith.constant 0 : i32
    %c0_i32_0 = arith.constant 0 : i32
    %c0_i32_1 = arith.constant 0 : i32
    return %c0_i32, %c0_i32_0 : i32, i32
  }
  func.func @transform_4(%arg0: i32) -> (i32, i32) {
    %c0_i32 = arith.constant 0 : i32
    %c0_i32_0 = arith.constant 0 : i32
    %c0_i32_1 = arith.constant 0 : i32
    return %c0_i32, %c0_i32_0 : i32, i32
  }
  func.func @transform_5(%arg0: i32) -> (i32, i32) {
    %c0_i32 = arith.constant 0 : i32
    %c0_i32_0 = arith.constant 0 : i32
    %c0_i32_1 = arith.constant 0 : i32
    return %c0_i32, %c0_i32_0 : i32, i32
  }
  func.func @transform_6(%arg0: i32) -> (i32, i32) {
    %c0_i32 = arith.constant 0 : i32
    %c0_i32_0 = arith.constant 0 : i32
    %c0_i32_1 = arith.constant 0 : i32
    return %c0_i32, %c0_i32_0 : i32, i32
  }
  func.func @transform_7(%arg0: i32) -> (i32, i32) {
    %c0_i32 = arith.constant 0 : i32
    %c0_i32_0 = arith.constant 0 : i32
    %c0_i32_1 = arith.constant 0 : i32
    return %c0_i32, %c0_i32_0 : i32, i32
  }
  func.func @transform_8(%arg0: i32) -> (i32, i32) {
    %c0_i32 = arith.constant 0 : i32
    %c0_i32_0 = arith.constant 0 : i32
    %c0_i32_1 = arith.constant 0 : i32
    return %c0_i32, %c0_i32_0 : i32, i32
  }
  func.func @transform_9(%arg0: i32) -> (i32, i32) {
    %c0_i32 = arith.constant 0 : i32
    %c0_i32_0 = arith.constant 0 : i32
    return %arg0, %c0_i32 : i32, i32
  }
}

</mosaic_0001>

<llo_original>
// kernel: tpu_custom_call.1
$region0: #{tpu_custom_call.1}
  #allocation0 [shape = 'u32[]', space=smem, size = 0x4, offset = 0x4, fixed_abs, tag = 'smem constant byte address 0x4 - core index']
  #allocation1 [shape = 'u32[72,128]{1,0:T(1,128)}', space=vmem, size = 0x9000, scoped, tag = 'internal scratch']
  %s0 = inlined_call_operand.hbm [shape: f32[8,24], index: 0, kind: input, shape index: {}]
  %s1 = inlined_call_operand.hbm [shape: f32[24,64], index: 1, kind: input, shape index: {}]
  %s2 = inlined_call_operand.vmem [shape: f32[1,64], index: 2, kind: input, shape index: {}]
  %s3 = inlined_call_operand.vmem [shape: f32[64,64], index: 3, kind: input, shape index: {}]
  %s4 = inlined_call_operand.vmem [shape: f32[1,64], index: 4, kind: input, shape index: {}]
  %s5 = inlined_call_operand.vmem [shape: f32[64,32], index: 5, kind: input, shape index: {}]
  %s6 = inlined_call_operand.vmem [shape: f32[1,32], index: 6, kind: input, shape index: {}]
  %s7 = inlined_call_operand.vmem [shape: f32[32,128], index: 7, kind: input, shape index: {}]
  %s8 = inlined_call_operand.vmem [shape: f32[1,128], index: 8, kind: input, shape index: {}]
  %s9 = inlined_call_operand.hbm [shape: f32[8,128], index: 9, kind: output, shape index: {}]
  %s10 = sld [smem:[#allocation0]]
  $region54: #{tpu_custom_call.1} parent=0
    _
  %s12 = ssub.s32 1, %s10
  %s13 = scalar_select 0, %s12, %s10
  $region1: #{tpu_custom_call.1} parent=0
    #allocation2 [shape = 'u8[4096]{0}', space=vmem, size = 0x1000, scoped, tag = 'input window, operand 0, single buffered']
    #allocation3 [shape = 's32[1]{0}', space=sflag, size = 0x4, scoped, tag = 'scoped memory for tpu_custom_call.1']
    #allocation4 [shape = 's32[1]{0}', space=sflag, size = 0x4, scoped, tag = 'scoped memory for tpu_custom_call.1']
    #allocation5 [shape = 'u8[12288]{0}', space=vmem, size = 0x3000, scoped, tag = 'input window, operand 1, single buffered']
    #allocation6 [shape = 's32[1]{0}', space=sflag, size = 0x4, scoped, tag = 'scoped memory for tpu_custom_call.1']
    #allocation7 [shape = 'u8[4096]{0}', space=vmem, size = 0x1000, scoped, tag = 'output window, operand 0, single buffered']
    %14 = vsyncpa [#allocation3], 0
    %15 = vsyncpa [#allocation6], 0
    %16 = vsyncpa [#allocation4], 0
    // Predicated region
    $region2: #{tpu_custom_call.1} parent=1 // pred_check
      _
    $region3: #{tpu_custom_call.1} parent=1 // pred_check_branch
      %18 = sbr.rel (0) target = $region5
    $region4: #{tpu_custom_call.1} parent=1 // pred_region
      %20 = vsyncadd [#allocation3], 0
      %s22 = sshll.u32 %s0, 4
      %s23 = int_to_ptr.hbm [resolvable:$true] %s22
      %s24 = sshll.u32 [#allocation2], 4
      %s25 = int_to_ptr.vmem [resolvable:$true] %s24
      %27 = dma.hbm_to_vmem [thread:$0]  %s23, 128, %s25, [#allocation3]
    $region5: #{tpu_custom_call.1} parent=1 // pred_fallthru
      _
    // Predicated region
    $region6: #{tpu_custom_call.1} parent=1 // pred_check
      _
    $region7: #{tpu_custom_call.1} parent=1 // pred_check_branch
      %29 = sbr.rel (0) target = $region9
    $region8: #{tpu_custom_call.1} parent=1 // pred_region
      %31 = vsyncadd [#allocation6], 0
      %s32 = sshll.u32 %s1, 4
      %s33 = int_to_ptr.hbm [resolvable:$true] %s32
      %s34 = sshll.u32 [#allocation5], 4
      %s35 = int_to_ptr.vmem [resolvable:$true] %s34
      %40 = dma.hbm_to_vmem [thread:$0]  %s33, 384, %s35, [#allocation6], 128, 128, 8
    $region9: #{tpu_custom_call.1} parent=1 // pred_fallthru
      _
    // Predicated region
    $region10: #{tpu_custom_call.1} parent=1 // pred_check
      _
    $region11: #{tpu_custom_call.1} parent=1 // pred_check_branch
      %42 = sbr.rel (0) target = $region13
    $region12: #{tpu_custom_call.1} parent=1 // pred_region
      _
    $region13: #{tpu_custom_call.1} parent=1 // pred_fallthru
      _
    // Predicated region
    $region14: #{tpu_custom_call.1} parent=1 // pred_check
      _
    $region15: #{tpu_custom_call.1} parent=1 // pred_check_branch
      %44 = sbr.rel (0) target = $region17
    $region16: #{tpu_custom_call.1} parent=1 // pred_region
      _
    $region17: #{tpu_custom_call.1} parent=1 // pred_fallthru
      _
    // Predicated region
    $region18: #{tpu_custom_call.1} parent=1 // pred_check
      _
    $region19: #{tpu_custom_call.1} parent=1 // pred_check_branch
      %46 = sbr.rel (0) target = $region21
    $region20: #{tpu_custom_call.1} parent=1 // pred_region
      _
    $region21: #{tpu_custom_call.1} parent=1 // pred_fallthru
      _
    // Predicated region
    $region22: #{tpu_custom_call.1} parent=1 // pred_check
      _
    $region23: #{tpu_custom_call.1} parent=1 // pred_check_branch
      %48 = sbr.rel (0) target = $region25
    $region24: #{tpu_custom_call.1} parent=1 // pred_region
      _
    $region25: #{tpu_custom_call.1} parent=1 // pred_fallthru
      _
    // Predicated region
    $region26: #{tpu_custom_call.1} parent=1 // pred_check
      _
    $region27: #{tpu_custom_call.1} parent=1 // pred_check_branch
      %50 = sbr.rel (0) target = $region29
    $region28: #{tpu_custom_call.1} parent=1 // pred_region
      _
    $region29: #{tpu_custom_call.1} parent=1 // pred_fallthru
      _
    // Predicated region
    $region30: #{tpu_custom_call.1} parent=1 // pred_check
      _
    $region31: #{tpu_custom_call.1} parent=1 // pred_check_branch
      %52 = sbr.rel (0) target = $region33
    $region32: #{tpu_custom_call.1} parent=1 // pred_region
      _
    $region33: #{tpu_custom_call.1} parent=1 // pred_fallthru
      _
    // Predicated region
    $region34: #{tpu_custom_call.1} parent=1 // pred_check
      _
    $region35: #{tpu_custom_call.1} parent=1 // pred_check_branch
      %54 = sbr.rel (0) target = $region37
    $region36: #{tpu_custom_call.1} parent=1 // pred_region
      _
    $region37: #{tpu_custom_call.1} parent=1 // pred_fallthru
      _
    // Predicated region
    $region38: #{tpu_custom_call.1} parent=1 // pred_check
      _
    $region39: #{tpu_custom_call.1} parent=1 // pred_check_branch
      %56 = sbr.rel (0) target = $region41
    $region40: #{tpu_custom_call.1} parent=1 // pred_region
      %58 = dma.done [#allocation3], 128
    $region41: #{tpu_custom_call.1} parent=1 // pred_fallthru
      _
    // Predicated region
    $region42: #{tpu_custom_call.1} parent=1 // pred_check
      _
    $region43: #{tpu_custom_call.1} parent=1 // pred_check_branch
      %60 = sbr.rel (0) target = $region45
    $region44: #{tpu_custom_call.1} parent=1 // pred_region
      %62 = dma.done [#allocation6], 384
    $region45: #{tpu_custom_call.1} parent=1 // pred_fallthru
      _
    %v63 = vld [vmem:[#allocation2] sm:$0xff]
    %v64 = vld [vmem:[#allocation5] sm:$0xff]
    %v65 = vld [vmem:[#allocation5 + $0x8] sm:$0xff]
    %v66 = vld [vmem:[#allocation5 + $0x10] sm:$0xff]
    %v67 = vld [vmem:[%s2] sm:$0x1]
    %v69 = vperm.slane %v67, 0
    %vm71 = vcmask 195584
    %v73 = vsel %vm71, %v63, 0
    %75 = vmatpush.msra.mxu0 0.0
    %76 = vmatpush.msra.mxu0 0.0
    %77 = vmatpush.msra.mxu0 0.0
    %78 = vmatpush.msra.mxu0 0.0
    %79 = vmatpush.msra.mxu0 0.0
    %80 = vmatpush.msra.mxu0 0.0
    %81 = vmatpush.msra.mxu0 0.0
    %82 = vmatpush.msra.mxu0 0.0
    %83 = vmatpush.msra.mxu0 0.0
    %84 = vmatpush.msra.mxu0 0.0
    %85 = vmatpush.msra.mxu0 0.0
    %86 = vmatpush.msra.mxu0 0.0
    %87 = vmatpush.msra.mxu0 0.0
    %88 = vmatpush.msra.mxu0 %v66
    %89 = vmatpush.msra.mxu0 %v65
    %90 = vmatpush.msra.mxu0 %v64
    %91 = vmatmul.f32.gmra.mxu0 %v73
    %v92 = vpop.f32.mrf.mxu0
    %v93 = vadd.f32 %v69, %v92
    %94 = vdwg.mxu0
    %v95 = vmax.f32 %v93, 0.0
    %v96 = vld [vmem:[%s3] sm:$0xff]
    %v97 = vld [vmem:[%s3 + $0x8] sm:$0xff]
    %v98 = vld [vmem:[%s3 + $0x10] sm:$0xff]
    %v99 = vld [vmem:[%s3 + $0x18] sm:$0xff]
    %v100 = vld [vmem:[%s3 + $0x20] sm:$0xff]
    %v101 = vld [vmem:[%s3 + $0x28] sm:$0xff]
    %v102 = vld [vmem:[%s3 + $0x30] sm:$0xff]
    %v103 = vld [vmem:[%s3 + $0x38] sm:$0xff]
    %v104 = vld [vmem:[%s4] sm:$0x1]
    %v106 = vperm.slane %v104, 0
    %vm108 = vcmask 523264
    %v110 = vsel %vm108, %v95, 0
    %112 = vmatpush.msra.mxu0 0.0
    %113 = vmatpush.msra.mxu0 0.0
    %114 = vmatpush.msra.mxu0 0.0
    %115 = vmatpush.msra.mxu0 0.0
    %116 = vmatpush.msra.mxu0 0.0
    %117 = vmatpush.msra.mxu0 0.0
    %118 = vmatpush.msra.mxu0 0.0
    %119 = vmatpush.msra.mxu0 0.0
    %120 = vmatpush.msra.mxu0 %v103
    %121 = vmatpush.msra.mxu0 %v102
    %122 = vmatpush.msra.mxu0 %v101
    %123 = vmatpush.msra.mxu0 %v100
    %124 = vmatpush.msra.mxu0 %v99
    %125 = vmatpush.msra.mxu0 %v98
    %126 = vmatpush.msra.mxu0 %v97
    %127 = vmatpush.msra.mxu0 %v96
    %128 = vmatmul.f32.gmra.mxu0 %v110
    %v129 = vpop.f32.mrf.mxu0
    %v130 = vadd.f32 %v106, %v129
    %131 = vdwg.mxu0
    %v132 = vld [vmem:[%s5] sm:$0xff]
    %v133 = vld [vmem:[%s5 + $0x8] sm:$0xff]
    %v134 = vld [vmem:[%s5 + $0x10] sm:$0xff]
    %v135 = vld [vmem:[%s5 + $0x18] sm:$0xff]
    %v136 = vld [vmem:[%s5 + $0x20] sm:$0xff]
    %v137 = vld [vmem:[%s5 + $0x28] sm:$0xff]
    %v138 = vld [vmem:[%s5 + $0x30] sm:$0xff]
    %v139 = vld [vmem:[%s5 + $0x38] sm:$0xff]
    %v140 = vld [vmem:[%s6] sm:$0x1]
    %v142 = vperm.slane %v140, 0
    %v145 = vsel %vm108, %v130, 0
    %147 = vmatpush.msra.mxu0 0.0
    %148 = vmatpush.msra.mxu0 0.0
    %149 = vmatpush.msra.mxu0 0.0
    %150 = vmatpush.msra.mxu0 0.0
    %151 = vmatpush.msra.mxu0 0.0
    %152 = vmatpush.msra.mxu0 0.0
    %153 = vmatpush.msra.mxu0 0.0
    %154 = vmatpush.msra.mxu0 0.0
    %155 = vmatpush.msra.mxu0 %v139
    %156 = vmatpush.msra.mxu0 %v138
    %157 = vmatpush.msra.mxu0 %v137
    %158 = vmatpush.msra.mxu0 %v136
    %159 = vmatpush.msra.mxu0 %v135
    %160 = vmatpush.msra.mxu0 %v134
    %161 = vmatpush.msra.mxu0 %v133
    %162 = vmatpush.msra.mxu0 %v132
    %163 = vmatmul.f32.gmra.mxu0 %v145
    %v164 = vpop.f32.mrf.mxu0
    %v165 = vadd.f32 %v142, %v164
    %166 = vdwg.mxu0
    %v167 = vmax.f32 %v165, 0.0
    %v168 = vld [vmem:[%s7] sm:$0xff]
    %v169 = vld [vmem:[%s7 + $0x8] sm:$0xff]
    %v170 = vld [vmem:[%s7 + $0x10] sm:$0xff]
    %v171 = vld [vmem:[%s7 + $0x18] sm:$0xff]
    %v172 = vld [vmem:[%s8] sm:$0x1]
    %v174 = vperm.slane %v172, 0
    %vm176 = vcmask 261120
    %v178 = vsel %vm176, %v167, 0
    %180 = vmatpush.msra.mxu0 0.0
    %181 = vmatpush.msra.mxu0 0.0
    %182 = vmatpush.msra.mxu0 0.0
    %183 = vmatpush.msra.mxu0 0.0
    %184 = vmatpush.msra.mxu0 0.0
    %185 = vmatpush.msra.mxu0 0.0
    %186 = vmatpush.msra.mxu0 0.0
    %187 = vmatpush.msra.mxu0 0.0
    %188 = vmatpush.msra.mxu0 0.0
    %189 = vmatpush.msra.mxu0 0.0
    %190 = vmatpush.msra.mxu0 0.0
    %191 = vmatpush.msra.mxu0 0.0
    %192 = vmatpush.msra.mxu0 %v171
    %193 = vmatpush.msra.mxu0 %v170
    %194 = vmatpush.msra.mxu0 %v169
    %195 = vmatpush.msra.mxu0 %v168
    %196 = vmatmul.f32.gmra.mxu0 %v178
    %v197 = vpop.f32.mrf.mxu0
    %v198 = vadd.f32 %v174, %v197
    %199 = vdwg.mxu0
    %200 = vst [vmem:[#allocation7] sm:$0xff] %v198
    // Predicated region
    $region46: #{tpu_custom_call.1} parent=1 // pred_check
      _
    $region47: #{tpu_custom_call.1} parent=1 // pred_check_branch
      %202 = sbr.rel (0) target = $region49
    $region48: #{tpu_custom_call.1} parent=1 // pred_region
      %204 = vsyncadd [#allocation4], 0
      %s206 = sshll.u32 [#allocation7], 4
      %s207 = int_to_ptr.vmem [resolvable:$true] %s206
      %s208 = sshll.u32 %s9, 4
      %s209 = int_to_ptr.hbm [resolvable:$true] %s208
      %211 = dma.vmem_to_hbm [thread:$0]  %s207, 128, %s209, [#allocation4]
    $region49: #{tpu_custom_call.1} parent=1 // pred_fallthru
      _
    // Predicated region
    $region50: #{tpu_custom_call.1} parent=1 // pred_check
      _
    $region51: #{tpu_custom_call.1} parent=1 // pred_check_branch
      %213 = sbr.rel (0) target = $region53
    $region52: #{tpu_custom_call.1} parent=1 // pred_region
      %215 = dma.done [#allocation4], 128
    $region53: #{tpu_custom_call.1} parent=1 // pred_fallthru
      _
    %216 = vsyncpa [#allocation3], 1
    %217 = vsyncpa [#allocation6], 1
    %218 = vsyncpa [#allocation4], 1

// kernel: tpu_custom_call.1
$region0: #{tpu_custom_call.1}
  #allocation0 [shape = 'u32[]', space=smem, size = 0x4, offset = 0x4, fixed_abs, tag = 'smem constant byte address 0x4 - core index']
  #allocation1 [shape = 'u32[72,128]{1,0:T(1,128)}', space=vmem, size = 0x9000, scoped, tag = 'internal scratch']
  %s0 = inlined_call_operand.hbm [shape: f32[8,24], index: 0, kind: input, shape index: {}]
  %s1 = inlined_call_operand.hbm [shape: f32[24,64], index: 1, kind: input, shape index: {}]
  %s2 = inlined_call_operand.vmem [shape: f32[1,64], index: 2, kind: input, shape index: {}]
  %s3 = inlined_call_operand.vmem [shape: f32[64,64], index: 3, kind: input, shape index: {}]
  %s4 = inlined_call_operand.vmem [shape: f32[1,64], index: 4, kind: input, shape index: {}]
  %s5 = inlined_call_operand.vmem [shape: f32[64,32], index: 5, kind: input, shape index: {}]
  %s6 = inlined_call_operand.vmem [shape: f32[1,32], index: 6, kind: input, shape index: {}]
  %s7 = inlined_call_operand.vmem [shape: f32[32,128], index: 7, kind: input, shape index: {}]
  %s8 = inlined_call_operand.vmem [shape: f32[1,128], index: 8, kind: input, shape index: {}]
  %s9 = inlined_call_operand.hbm [shape: f32[8,128], index: 9, kind: output, shape index: {}]
  %s10 = sld [smem:[#allocation0]]
  $region54: #{tpu_custom_call.1} parent=0
    _
  %s12 = ssub.s32 1, %s10
  %s13 = scalar_select 0, %s12, %s10
  $region1: #{tpu_custom_call.1} parent=0
    #allocation2 [shape = 'u8[4096]{0}', space=vmem, size = 0x1000, scoped, tag = 'input window, operand 0, single buffered']
    #allocation3 [shape = 's32[1]{0}', space=sflag, size = 0x4, scoped, tag = 'scoped memory for tpu_custom_call.1']
    #allocation4 [shape = 's32[1]{0}', space=sflag, size = 0x4, scoped, tag = 'scoped memory for tpu_custom_call.1']
    #allocation5 [shape = 'u8[12288]{0}', space=vmem, size = 0x3000, scoped, tag = 'input window, operand 1, single buffered']
    #allocation6 [shape = 's32[1]{0}', space=sflag, size = 0x4, scoped, tag = 'scoped memory for tpu_custom_call.1']
    #allocation7 [shape = 'u8[4096]{0}', space=vmem, size = 0x1000, scoped, tag = 'output window, operand 0, single buffered']
    %14 = vsyncpa [#allocation3], 0
    %15 = vsyncpa [#allocation6], 0
    %16 = vsyncpa [#allocation4], 0
    // Predicated region
    $region2: #{tpu_custom_call.1} parent=1 // pred_check
      _
    $region3: #{tpu_custom_call.1} parent=1 // pred_check_branch
      %18 = sbr.rel (0) target = $region5
    $region4: #{tpu_custom_call.1} parent=1 // pred_region
      %20 = vsyncadd [#allocation3], 0
      %s22 = sshll.u32 %s0, 4
      %s23 = int_to_ptr.hbm [resolvable:$true] %s22
      %s24 = sshll.u32 [#allocation2], 4
      %s25 = int_to_ptr.vmem [resolvable:$true] %s24
      %27 = dma.hbm_to_vmem [thread:$0]  %s23, 128, %s25, [#allocation3]
    $region5: #{tpu_custom_call.1} parent=1 // pred_fallthru
      _
    // Predicated region
    $region6: #{tpu_custom_call.1} parent=1 // pred_check
      _
    $region7: #{tpu_custom_call.1} parent=1 // pred_check_branch
      %29 = sbr.rel (0) target = $region9
    $region8: #{tpu_custom_call.1} parent=1 // pred_region
      %31 = vsyncadd [#allocation6], 0
      %s32 = sshll.u32 %s1, 4
      %s33 = int_to_ptr.hbm [resolvable:$true] %s32
      %s34 = sshll.u32 [#allocation5], 4
      %s35 = int_to_ptr.vmem [resolvable:$true] %s34
      %40 = dma.hbm_to_vmem [thread:$0]  %s33, 384, %s35, [#allocation6], 128, 128, 8
    $region9: #{tpu_custom_call.1} parent=1 // pred_fallthru
      _
    // Predicated region
    $region10: #{tpu_custom_call.1} parent=1 // pred_check
      _
    $region11: #{tpu_custom_call.1} parent=1 // pred_check_branch
      %42 = sbr.rel (0) target = $region13
    $region12: #{tpu_custom_call.1} parent=1 // pred_region
      _
    $region13: #{tpu_custom_call.1} parent=1 // pred_fallthru
      _
    // Predicated region
    $region14: #{tpu_custom_call.1} parent=1 // pred_check
      _
    $region15: #{tpu_custom_call.1} parent=1 // pred_check_branch
      %44 = sbr.rel (0) target = $region17
    $region16: #{tpu_custom_call.1} parent=1 // pred_region
      _
    $region17: #{tpu_custom_call.1} parent=1 // pred_fallthru
      _
    // Predicated region
    $region18: #{tpu_custom_call.1} parent=1 // pred_check
      _
    $region19: #{tpu_custom_call.1} parent=1 // pred_check_branch
      %46 = sbr.rel (0) target = $region21
    $region20: #{tpu_custom_call.1} parent=1 // pred_region
      _
    $region21: #{tpu_custom_call.1} parent=1 // pred_fallthru
      _
    // Predicated region
    $region22: #{tpu_custom_call.1} parent=1 // pred_check
      _
    $region23: #{tpu_custom_call.1} parent=1 // pred_check_branch
      %48 = sbr.rel (0) target = $region25
    $region24: #{tpu_custom_call.1} parent=1 // pred_region
      _
    $region25: #{tpu_custom_call.1} parent=1 // pred_fallthru
      _
    // Predicated region
    $region26: #{tpu_custom_call.1} parent=1 // pred_check
      _
    $region27: #{tpu_custom_call.1} parent=1 // pred_check_branch
      %50 = sbr.rel (0) target = $region29
    $region28: #{tpu_custom_call.1} parent=1 // pred_region
      _
    $region29: #{tpu_custom_call.1} parent=1 // pred_fallthru
      _
    // Predicated region
    $region30: #{tpu_custom_call.1} parent=1 // pred_check
      _
    $region31: #{tpu_custom_call.1} parent=1 // pred_check_branch
      %52 = sbr.rel (0) target = $region33
    $region32: #{tpu_custom_call.1} parent=1 // pred_region
      _
    $region33: #{tpu_custom_call.1} parent=1 // pred_fallthru
      _
    // Predicated region
    $region34: #{tpu_custom_call.1} parent=1 // pred_check
      _
    $region35: #{tpu_custom_call.1} parent=1 // pred_check_branch
      %54 = sbr.rel (0) target = $region37
    $region36: #{tpu_custom_call.1} parent=1 // pred_region
      _
    $region37: #{tpu_custom_call.1} parent=1 // pred_fallthru
      _
    // Predicated region
    $region38: #{tpu_custom_call.1} parent=1 // pred_check
      _
    $region39: #{tpu_custom_call.1} parent=1 // pred_check_branch
      %56 = sbr.rel (0) target = $region41
    $region40: #{tpu_custom_call.1} parent=1 // pred_region
      %58 = dma.done [#allocation3], 128
    $region41: #{tpu_custom_call.1} parent=1 // pred_fallthru
      _
    // Predicated region
    $region42: #{tpu_custom_call.1} parent=1 // pred_check
      _
    $region43: #{tpu_custom_call.1} parent=1 // pred_check_branch
      %60 = sbr.rel (0) target = $region45
    $region44: #{tpu_custom_call.1} parent=1 // pred_region
      %62 = dma.done [#allocation6], 384
    $region45: #{tpu_custom_call.1} parent=1 // pred_fallthru
      _
    %v63 = vld [vmem:[#allocation2] sm:$0xff]
    %v64 = vld [vmem:[#allocation5] sm:$0xff]
    %v65 = vld [vmem:[#allocation5 + $0x8] sm:$0xff]
    %v66 = vld [vmem:[#allocation5 + $0x10] sm:$0xff]
    %v67 = vld [vmem:[%s2] sm:$0x1]
    %v69 = vperm.slane %v67, 0
    %vm71 = vcmask 195584
    %v73 = vsel %vm71, %v63, 0
    %75 = vmatpush.msra.mxu0 0.0
    %76 = vmatpush.msra.mxu0 0.0
    %77 = vmatpush.msra.mxu0 0.0
    %78 = vmatpush.msra.mxu0 0.0
    %79 = vmatpush.msra.mxu0 0.0
    %80 = vmatpush.msra.mxu0 0.0
    %81 = vmatpush.msra.mxu0 0.0
    %82 = vmatpush.msra.mxu0 0.0
    %83 = vmatpush.msra.mxu0 0.0
    %84 = vmatpush.msra.mxu0 0.0
    %85 = vmatpush.msra.mxu0 0.0
    %86 = vmatpush.msra.mxu0 0.0
    %87 = vmatpush.msra.mxu0 0.0
    %88 = vmatpush.msra.mxu0 %v66
    %89 = vmatpush.msra.mxu0 %v65
    %90 = vmatpush.msra.mxu0 %v64
    %91 = vmatmul.f32.gmra.mxu0 %v73
    %v92 = vpop.f32.mrf.mxu0
    %v93 = vadd.f32 %v69, %v92
    %94 = vdwg.mxu0
    %v95 = vmax.f32 %v93, 0.0
    %v96 = vld [vmem:[%s3] sm:$0xff]
    %v97 = vld [vmem:[%s3 + $0x8] sm:$0xff]
    %v98 = vld [vmem:[%s3 + $0x10] sm:$0xff]
    %v99 = vld [vmem:[%s3 + $0x18] sm:$0xff]
    %v100 = vld [vmem:[%s3 + $0x20] sm:$0xff]
    %v101 = vld [vmem:[%s3 + $0x28] sm:$0xff]
    %v102 = vld [vmem:[%s3 + $0x30] sm:$0xff]
    %v103 = vld [vmem:[%s3 + $0x38] sm:$0xff]
    %v104 = vld [vmem:[%s4] sm:$0x1]
    %v106 = vperm.slane %v104, 0
    %vm108 = vcmask 523264
    %v110 = vsel %vm108, %v95, 0
    %112 = vmatpush.msra.mxu0 0.0
    %113 = vmatpush.msra.mxu0 0.0
    %114 = vmatpush.msra.mxu0 0.0
    %115 = vmatpush.msra.mxu0 0.0
    %116 = vmatpush.msra.mxu0 0.0
    %117 = vmatpush.msra.mxu0 0.0
    %118 = vmatpush.msra.mxu0 0.0
    %119 = vmatpush.msra.mxu0 0.0
    %120 = vmatpush.msra.mxu0 %v103
    %121 = vmatpush.msra.mxu0 %v102
    %122 = vmatpush.msra.mxu0 %v101
    %123 = vmatpush.msra.mxu0 %v100
    %124 = vmatpush.msra.mxu0 %v99
    %125 = vmatpush.msra.mxu0 %v98
    %126 = vmatpush.msra.mxu0 %v97
    %127 = vmatpush.msra.mxu0 %v96
    %128 = vmatmul.f32.gmra.mxu0 %v110
    %v129 = vpop.f32.mrf.mxu0
    %v130 = vadd.f32 %v106, %v129
    %131 = vdwg.mxu0
    %v132 = vld [vmem:[%s5] sm:$0xff]
    %v133 = vld [vmem:[%s5 + $0x8] sm:$0xff]
    %v134 = vld [vmem:[%s5 + $0x10] sm:$0xff]
    %v135 = vld [vmem:[%s5 + $0x18] sm:$0xff]
    %v136 = vld [vmem:[%s5 + $0x20] sm:$0xff]
    %v137 = vld [vmem:[%s5 + $0x28] sm:$0xff]
    %v138 = vld [vmem:[%s5 + $0x30] sm:$0xff]
    %v139 = vld [vmem:[%s5 + $0x38] sm:$0xff]
    %v140 = vld [vmem:[%s6] sm:$0x1]
    %v142 = vperm.slane %v140, 0
    %v145 = vsel %vm108, %v130, 0
    %147 = vmatpush.msra.mxu0 0.0
    %148 = vmatpush.msra.mxu0 0.0
    %149 = vmatpush.msra.mxu0 0.0
    %150 = vmatpush.msra.mxu0 0.0
    %151 = vmatpush.msra.mxu0 0.0
    %152 = vmatpush.msra.mxu0 0.0
    %153 = vmatpush.msra.mxu0 0.0
    %154 = vmatpush.msra.mxu0 0.0
    %155 = vmatpush.msra.mxu0 %v139
    %156 = vmatpush.msra.mxu0 %v138
    %157 = vmatpush.msra.mxu0 %v137
    %158 = vmatpush.msra.mxu0 %v136
    %159 = vmatpush.msra.mxu0 %v135
    %160 = vmatpush.msra.mxu0 %v134
    %161 = vmatpush.msra.mxu0 %v133
    %162 = vmatpush.msra.mxu0 %v132
    %163 = vmatmul.f32.gmra.mxu0 %v145
    %v164 = vpop.f32.mrf.mxu0
    %v165 = vadd.f32 %v142, %v164
    %166 = vdwg.mxu0
    %v167 = vmax.f32 %v165, 0.0
    %v168 = vld [vmem:[%s7] sm:$0xff]
    %v169 = vld [vmem:[%s7 + $0x8] sm:$0xff]
    %v170 = vld [vmem:[%s7 + $0x10] sm:$0xff]
    %v171 = vld [vmem:[%s7 + $0x18] sm:$0xff]
    %v172 = vld [vmem:[%s8] sm:$0x1]
    %v174 = vperm.slane %v172, 0
    %vm176 = vcmask 261120
    %v178 = vsel %vm176, %v167, 0
    %180 = vmatpush.msra.mxu0 0.0
    %181 = vmatpush.msra.mxu0 0.0
    %182 = vmatpush.msra.mxu0 0.0
    %183 = vmatpush.msra.mxu0 0.0
    %184 = vmatpush.msra.mxu0 0.0
    %185 = vmatpush.msra.mxu0 0.0
    %186 = vmatpush.msra.mxu0 0.0
    %187 = vmatpush.msra.mxu0 0.0
    %188 = vmatpush.msra.mxu0 0.0
    %189 = vmatpush.msra.mxu0 0.0
    %190 = vmatpush.msra.mxu0 0.0
    %191 = vmatpush.msra.mxu0 0.0
    %192 = vmatpush.msra.mxu0 %v171
    %193 = vmatpush.msra.mxu0 %v170
    %194 = vmatpush.msra.mxu0 %v169
    %195 = vmatpush.msra.mxu0 %v168
    %196 = vmatmul.f32.gmra.mxu0 %v178
    %v197 = vpop.f32.mrf.mxu0
    %v198 = vadd.f32 %v174, %v197
    %199 = vdwg.mxu0
    %200 = vst [vmem:[#allocation7] sm:$0xff] %v198
    // Predicated region
    $region46: #{tpu_custom_call.1} parent=1 // pred_check
      _
    $region47: #{tpu_custom_call.1} parent=1 // pred_check_branch
      %202 = sbr.rel (0) target = $region49
    $region48: #{tpu_custom_call.1} parent=1 // pred_region
      %204 = vsyncadd [#allocation4], 0
      %s206 = sshll.u32 [#allocation7], 4
      %s207 = int_to_ptr.vmem [resolvable:$true] %s206
      %s208 = sshll.u32 %s9, 4
      %s209 = int_to_ptr.hbm [resolvable:$true] %s208
      %211 = dma.vmem_to_hbm [thread:$0]  %s207, 128, %s209, [#allocation4]
    $region49: #{tpu_custom_call.1} parent=1 // pred_fallthru
      _
    // Predicated region
    $region50: #{tpu_custom_call.1} parent=1 // pred_check
      _
    $region51: #{tpu_custom_call.1} parent=1 // pred_check_branch
      %213 = sbr.rel (0) target = $region53
    $region52: #{tpu_custom_call.1} parent=1 // pred_region
      %215 = dma.done [#allocation4], 128
    $region53: #{tpu_custom_call.1} parent=1 // pred_fallthru
      _
    %216 = vsyncpa [#allocation3], 1
    %217 = vsyncpa [#allocation6], 1
    %218 = vsyncpa [#allocation4], 1

</llo_original>
